<compile_context>
chip_gen: v7x
topology: tpu7x:2x2x1
jax: 0.10.0
libtpu: 0.0.40
codegen_flags: <defaults>
</compile_context>

<pallas_src>
import functools

import jax
import jax.numpy as jnp
from jax.experimental import pallas as pl
from jax.experimental.pallas import tpu as pltpu


# ----------------------------------------------------------------------------
# Pallas kernel: both Q-heads computed in one invocation per batch tile.
# ----------------------------------------------------------------------------
def critic_kernel(
    state_ref, action_ref,             # (tm, in_dim) f32, (tm, act_dim) f32
    w1s_ref, w1a_ref, b1_ref,          # fused layer-1 (both heads); W1 split by input axis; bf16/bf16/f32
    w2a_ref, b2a_ref,                  # head-1 layer-2  (bf16 / f32)
    w2b_ref, b2b_ref,                  # head-2 layer-2  (bf16 / f32)
    w3a_ref, w3b_ref, b3_ref,          # final layers as (1, h1) f32 rows + fused (1, 2) bias
    q_ref,                             # fused output (tm, 2) f32
):
    # Layer 1 for both heads at once.  Splitting W1 along its input axis fuses
    # torch.cat([state, action], dim=1) into two accumulating bf16 MXU dots
    # (no wrapper concat, no extra HBM round trip for xu).
    xs = state_ref[...].astype(jnp.bfloat16)
    xa = action_ref[...].astype(jnp.bfloat16)
    h1 = jnp.dot(xs, w1s_ref[...], preferred_element_type=jnp.float32)
    h1 = h1 + jnp.dot(xa, w1a_ref[...], preferred_element_type=jnp.float32)
    h1 = jnp.maximum(h1 + b1_ref[...], 0.0)               # (tm, 2*h0) f32

    h0 = w2a_ref.shape[0]
    h1a = h1[:, :h0].astype(jnp.bfloat16)                 # 128-aligned static slices
    h1b = h1[:, h0:].astype(jnp.bfloat16)

    # Layer 2: the dominant 256x256 matmuls, single-pass bf16 on the MXU.
    h2a = jnp.maximum(
        jnp.dot(h1a, w2a_ref[...], preferred_element_type=jnp.float32) + b2a_ref[...],
        0.0)
    h2b = jnp.maximum(
        jnp.dot(h1b, w2b_ref[...], preferred_element_type=jnp.float32) + b2b_ref[...],
        0.0)

    # Final layer (out_features = 1): f32 VPU multiply + XLU lane-reduction
    # instead of two (K=h1, N=1) near-empty MXU passes.
    q1 = jnp.sum(h2a * w3a_ref[...], axis=-1, keepdims=True)    # (tm, 1)
    q2 = jnp.sum(h2b * w3b_ref[...], axis=-1, keepdims=True)    # (tm, 1)

    # Single full-tile store of both heads (one store instead of two masked
    # column stores); column select via iota avoids a lane-unaligned concat.
    col = jax.lax.broadcasted_iota(jnp.int32, q_ref.shape, 1)   # (tm, 2)
    q_ref[...] = jnp.where(col == 0, q1, q2) + b3_ref[...]


# ----------------------------------------------------------------------------
# One-time parameter repacking (hoisted out of the hot path).
# ----------------------------------------------------------------------------
def prepare_critic_params(params, input_dim):
    """Pack + cast the per-head weights once; call outside the training loop."""
    p1, p2 = params["q1"], params["q2"]
    h1d = p1["w2"].shape[1]

    # Fuse both heads' layer-1 weights -> (D, 2*h0), split along the input
    # axis so torch.cat([state, action]) happens inside the matmuls.
    w1_cat = jnp.concatenate([p1["w1"], p2["w1"]], axis=1)       # (D, 2*h0)

    packed = {
        "w1s": w1_cat[:input_dim, :].astype(jnp.bfloat16),       # (in_dim,  2*h0)
        "w1a": w1_cat[input_dim:, :].astype(jnp.bfloat16),       # (act_dim, 2*h0)
        "b1":  jnp.concatenate([p1["b1"], p2["b1"]], axis=1).astype(jnp.float32),
        "w2a": p1["w2"].astype(jnp.bfloat16),
        "b2a": p1["b2"].astype(jnp.float32),
        "w2b": p2["w2"].astype(jnp.bfloat16),
        "b2b": p2["b2"].astype(jnp.float32),
        "w3a": p1["w3"].reshape(1, h1d).astype(jnp.float32),     # VPU path stays f32
        "w3b": p2["w3"].reshape(1, h1d).astype(jnp.float32),
        "b3":  jnp.concatenate([p1["b3"], p2["b3"]], axis=1).astype(jnp.float32),
    }
    return packed


# ----------------------------------------------------------------------------
# Batch-tile selection (static under jit).
# ----------------------------------------------------------------------------
def _round_up(x, m):
    return ((x + m - 1) // m) * m


def _pick_batch_tiling(B, block_rows):
    """Returns (tm, padded_B, num_steps)."""
    B8 = _round_up(max(B, 1), 8)        # sublane alignment only
    if B8 <= 256:
        # One small tile; splitting a tiny batch only adds ~0.35us/step overhead.
        return B8, B8, 1
    # >= 2 grid steps so v7x can shard the batch across its two TensorCores;
    # tile chosen to (almost) divide the padded batch -> <= 7 wasted rows/step.
    n = max(2, -(-B8 // block_rows))    # ceil division
    tm = _round_up(-(-B8 // n), 8)
    return tm, n * tm, n


# ----------------------------------------------------------------------------
# Wrapper: batch-tiled pallas_call (hot path; params already packed).
# ----------------------------------------------------------------------------
@functools.partial(jax.jit, static_argnames=("block_rows",))
def critic_forward(state, action, packed, block_rows=512):
    state = state.astype(jnp.float32)
    action = action.astype(jnp.float32)
    B, input_dim = state.shape
    _, action_dim = action.shape

    tm, Bp, n_steps = _pick_batch_tiling(B, block_rows)
    pad = Bp - B
    if pad:
        state = jnp.pad(state, ((0, pad), (0, 0)))
        action = jnp.pad(action, ((0, pad), (0, 0)))
    grid = (n_steps,)

    def row_spec(ncols):
        return pl.BlockSpec((tm, ncols), lambda i: (i, 0))

    def full_spec(a):
        return pl.BlockSpec(a.shape, lambda i: (0, 0))

    weights = (packed["w1s"], packed["w1a"], packed["b1"],
               packed["w2a"], packed["b2a"], packed["w2b"], packed["b2b"],
               packed["w3a"], packed["w3b"], packed["b3"])

    q = pl.pallas_call(
        critic_kernel,
        out_shape=jax.ShapeDtypeStruct((Bp, 2), jnp.float32),
        grid=grid,
        in_specs=[row_spec(input_dim), row_spec(action_dim)]
                 + [full_spec(w) for w in weights],
        out_specs=row_spec(2),
        compiler_params=pltpu.CompilerParams(
            dimension_semantics=("parallel",)),
    )(state, action, *weights)

    q = q[:B]
    return q[:, 0:1], q[:, 1:2]


# ----------------------------------------------------------------------------
# Deterministic parameter init (matches nn.Linear default U(-1/sqrt(fan_in))).
# Weights stored transposed, (in, out); biases as (1, out).
# ----------------------------------------------------------------------------
def init_linear(key, fan_in, fan_out):
    kw, kb = jax.random.split(key)
    bound = 1.0 / jnp.sqrt(float(fan_in))
    w = jax.random.uniform(kw, (fan_in, fan_out), jnp.float32, -bound, bound)
    b = jax.random.uniform(kb, (1, fan_out), jnp.float32, -bound, bound)
    return w, b


def init_critic_params(key, input_dim, action_dim, hidden_dim):
    d = input_dim + action_dim
    h0, h1 = hidden_dim
    keys = jax.random.split(key, 6)
    params = {}
    for name, ks in (("q1", keys[:3]), ("q2", keys[3:])):
        w1, b1 = init_linear(ks[0], d, h0)
        w2, b2 = init_linear(ks[1], h0, h1)
        w3, b3 = init_linear(ks[2], h1, 1)
        params[name] = {"w1": w1, "b1": b1, "w2": w2, "b2": b2,
                        "w3": w3, "b3": b3}
    return params


# ----------------------------------------------------------------------------
# Pure-JAX f32 reference for correctness checking.
# ----------------------------------------------------------------------------
def critic_reference(state, action, params):
    xu = jnp.concatenate([state, action], axis=1).astype(jnp.float32)

    def mlp(p):
        h1 = jnp.maximum(xu @ p["w1"] + p["b1"], 0.0)
        h2 = jnp.maximum(h1 @ p["w2"] + p["b2"], 0.0)
        return h2 @ p["w3"] + p["b3"]

    return mlp(params["q1"]), mlp(params["q2"])


if __name__ == "__main__":
    # Small shapes consistent with the module's forward pass (module default
    # hidden_dim=[256, 256]).
    input_dim = 12       # state dimension
    action_dim = 4       # action dimension
    hidden_dim = [256, 256]

    key = jax.random.PRNGKey(0)
    k_state, k_action, k_params = jax.random.split(key, 3)
    params = init_critic_params(k_params, input_dim, action_dim, hidden_dim)
    packed = prepare_critic_params(params, input_dim)   # one-time, off hot path

    # bf16 MXU operands -> slightly loosened tolerance vs the f32 reference.
    ATOL = RTOL = 2e-2

    # Case 1: tiny batch (single grid step).
    batch = 8
    state = jax.random.normal(k_state, (batch, input_dim), jnp.float32)
    action = jax.random.normal(k_action, (batch, action_dim), jnp.float32)
    q1, q2 = critic_forward(state, action, packed)
    jax.block_until_ready((q1, q2))
    q1_ref, q2_ref = critic_reference(state, action, params)
    assert q1.shape == (batch, 1) and q2.shape == (batch, 1)
    assert jnp.allclose(q1, q1_ref, atol=ATOL, rtol=RTOL)
    assert jnp.allclose(q2, q2_ref, atol=ATOL, rtol=RTOL)

    # Case 2: awkward larger batch (multi-step grid + minimal padding path).
    batch2 = 300
    k_s2, k_a2 = jax.random.split(jax.random.PRNGKey(1))
    state2 = jax.random.normal(k_s2, (batch2, input_dim), jnp.float32)
    action2 = jax.random.normal(k_a2, (batch2, action_dim), jnp.float32)
    q1b, q2b = critic_forward(state2, action2, packed)
    jax.block_until_ready((q1b, q2b))
    q1b_ref, q2b_ref = critic_reference(state2, action2, params)
    assert q1b.shape == (batch2, 1) and q2b.shape == (batch2, 1)
    assert jnp.allclose(q1b, q1b_ref, atol=ATOL, rtol=RTOL)
    assert jnp.allclose(q2b, q2b_ref, atol=ATOL, rtol=RTOL)

    print("KERNEL_OK")
</pallas_src>

<mosaic_0001>
module attributes {stable_mosaic.version = 11 : i64} {
  func.func @critic_kernel(%arg0: i32, %arg1: memref<8x12xf32, #tpu.memory_space<vmem>>, %arg2: memref<8x4xf32, #tpu.memory_space<vmem>>, %arg3: memref<12x512xbf16, #tpu.memory_space<vmem>>, %arg4: memref<4x512xbf16, #tpu.memory_space<vmem>>, %arg5: memref<1x512xf32, #tpu.memory_space<vmem>>, %arg6: memref<256x256xbf16, #tpu.memory_space<vmem>>, %arg7: memref<1x256xf32, #tpu.memory_space<vmem>>, %arg8: memref<256x256xbf16, #tpu.memory_space<vmem>>, %arg9: memref<1x256xf32, #tpu.memory_space<vmem>>, %arg10: memref<1x256xf32, #tpu.memory_space<vmem>>, %arg11: memref<1x256xf32, #tpu.memory_space<vmem>>, %arg12: memref<1x2xf32, #tpu.memory_space<vmem>>, %arg13: memref<8x2xf32, #tpu.memory_space<vmem>>) attributes {dimension_semantics = [#tpu.dimension_semantics<parallel>], iteration_bounds = array<i64: 1>, scalar_prefetch = 0 : i64, scratch_operands = 0 : i64, tpu.core_type = #tpu.core_type<tc>, window_params = [{transform_indices = @transform_0, window_bounds = array<i64: 8, 12>}, {transform_indices = @transform_1, window_bounds = array<i64: 8, 4>}, {pipeline_mode = #tpu.pipeline_mode<synchronous>, transform_indices = @transform_2, window_bounds = array<i64: 12, 512>}, {pipeline_mode = #tpu.pipeline_mode<synchronous>, transform_indices = @transform_3, window_bounds = array<i64: 4, 512>}, {pipeline_mode = #tpu.pipeline_mode<synchronous>, transform_indices = @transform_4, window_bounds = array<i64: 1, 512>}, {pipeline_mode = #tpu.pipeline_mode<synchronous>, transform_indices = @transform_5, window_bounds = array<i64: 256, 256>}, {pipeline_mode = #tpu.pipeline_mode<synchronous>, transform_indices = @transform_6, window_bounds = array<i64: 1, 256>}, {pipeline_mode = #tpu.pipeline_mode<synchronous>, transform_indices = @transform_7, window_bounds = array<i64: 256, 256>}, {pipeline_mode = #tpu.pipeline_mode<synchronous>, transform_indices = @transform_8, window_bounds = array<i64: 1, 256>}, {pipeline_mode = #tpu.pipeline_mode<synchronous>, transform_indices = @transform_9, window_bounds = array<i64: 1, 256>}, {pipeline_mode = #tpu.pipeline_mode<synchronous>, transform_indices = @transform_10, window_bounds = array<i64: 1, 256>}, {pipeline_mode = #tpu.pipeline_mode<synchronous>, transform_indices = @transform_11, window_bounds = array<i64: 1, 2>}, {transform_indices = @transform_12, window_bounds = array<i64: 8, 2>}]} {
    %c0 = arith.constant 0 : index
    %c0_0 = arith.constant 0 : index
    %0 = vector.load %arg1[%c0, %c0_0] : memref<8x12xf32, #tpu.memory_space<vmem>>, vector<8x12xf32>
    %1 = arith.truncf %0 : vector<8x12xf32> to vector<8x12xbf16>
    %c0_1 = arith.constant 0 : index
    %c0_2 = arith.constant 0 : index
    %2 = vector.load %arg2[%c0_1, %c0_2] : memref<8x4xf32, #tpu.memory_space<vmem>>, vector<8x4xf32>
    %3 = arith.truncf %2 : vector<8x4xf32> to vector<8x4xbf16>
    %c0_3 = arith.constant 0 : index
    %c0_4 = arith.constant 0 : index
    %4 = vector.load %arg3[%c0_3, %c0_4] : memref<12x512xbf16, #tpu.memory_space<vmem>>, vector<12x512xbf16>
    %cst = arith.constant dense<0.000000e+00> : vector<8x512xf32>
    %5 = tpu.matmul %1, %4, %cst {dimension_numbers = #tpu.dot_dimension_numbers<[1], [0], [0], [1], [0, 0, 1, 1], [], []>} : vector<8x12xbf16>, vector<12x512xbf16>, vector<8x512xf32> -> vector<8x512xf32>
    %c0_5 = arith.constant 0 : index
    %c0_6 = arith.constant 0 : index
    %6 = vector.load %arg4[%c0_5, %c0_6] : memref<4x512xbf16, #tpu.memory_space<vmem>>, vector<4x512xbf16>
    %cst_7 = arith.constant dense<0.000000e+00> : vector<8x512xf32>
    %7 = tpu.matmul %3, %6, %cst_7 {dimension_numbers = #tpu.dot_dimension_numbers<[1], [0], [0], [1], [0, 0, 1, 1], [], []>} : vector<8x4xbf16>, vector<4x512xbf16>, vector<8x512xf32> -> vector<8x512xf32>
    %8 = arith.addf %5, %7 : vector<8x512xf32>
    %c0_8 = arith.constant 0 : index
    %c0_9 = arith.constant 0 : index
    %9 = vector.load %arg5[%c0_8, %c0_9] : memref<1x512xf32, #tpu.memory_space<vmem>>, vector<1x512xf32>
    %10 = vector.broadcast %9 : vector<1x512xf32> to vector<8x512xf32>
    %11 = arith.addf %8, %10 : vector<8x512xf32>
    %cst_10 = arith.constant 0.000000e+00 : f32
    %12 = vector.broadcast %cst_10 : f32 to vector<8x512xf32>
    %13 = arith.maximumf %11, %12 : vector<8x512xf32>
    %14 = vector.extract_strided_slice %13 {offsets = [0, 0], sizes = [8, 256], strides = [1, 1]} : vector<8x512xf32> to vector<8x256xf32>
    %15 = arith.truncf %14 : vector<8x256xf32> to vector<8x256xbf16>
    %16 = vector.extract_strided_slice %13 {offsets = [0, 256], sizes = [8, 256], strides = [1, 1]} : vector<8x512xf32> to vector<8x256xf32>
    %17 = arith.truncf %16 : vector<8x256xf32> to vector<8x256xbf16>
    %c0_11 = arith.constant 0 : index
    %c0_12 = arith.constant 0 : index
    %18 = vector.load %arg6[%c0_11, %c0_12] : memref<256x256xbf16, #tpu.memory_space<vmem>>, vector<256x256xbf16>
    %cst_13 = arith.constant dense<0.000000e+00> : vector<8x256xf32>
    %19 = tpu.matmul %15, %18, %cst_13 {dimension_numbers = #tpu.dot_dimension_numbers<[1], [0], [0], [1], [0, 0, 1, 1], [], []>} : vector<8x256xbf16>, vector<256x256xbf16>, vector<8x256xf32> -> vector<8x256xf32>
    %c0_14 = arith.constant 0 : index
    %c0_15 = arith.constant 0 : index
    %20 = vector.load %arg7[%c0_14, %c0_15] : memref<1x256xf32, #tpu.memory_space<vmem>>, vector<1x256xf32>
    %21 = vector.broadcast %20 : vector<1x256xf32> to vector<8x256xf32>
    %22 = arith.addf %19, %21 : vector<8x256xf32>
    %cst_16 = arith.constant 0.000000e+00 : f32
    %23 = vector.broadcast %cst_16 : f32 to vector<8x256xf32>
    %24 = arith.maximumf %22, %23 : vector<8x256xf32>
    %c0_17 = arith.constant 0 : index
    %c0_18 = arith.constant 0 : index
    %25 = vector.load %arg8[%c0_17, %c0_18] : memref<256x256xbf16, #tpu.memory_space<vmem>>, vector<256x256xbf16>
    %cst_19 = arith.constant dense<0.000000e+00> : vector<8x256xf32>
    %26 = tpu.matmul %17, %25, %cst_19 {dimension_numbers = #tpu.dot_dimension_numbers<[1], [0], [0], [1], [0, 0, 1, 1], [], []>} : vector<8x256xbf16>, vector<256x256xbf16>, vector<8x256xf32> -> vector<8x256xf32>
    %c0_20 = arith.constant 0 : index
    %c0_21 = arith.constant 0 : index
    %27 = vector.load %arg9[%c0_20, %c0_21] : memref<1x256xf32, #tpu.memory_space<vmem>>, vector<1x256xf32>
    %28 = vector.broadcast %27 : vector<1x256xf32> to vector<8x256xf32>
    %29 = arith.addf %26, %28 : vector<8x256xf32>
    %cst_22 = arith.constant 0.000000e+00 : f32
    %30 = vector.broadcast %cst_22 : f32 to vector<8x256xf32>
    %31 = arith.maximumf %29, %30 : vector<8x256xf32>
    %c0_23 = arith.constant 0 : index
    %c0_24 = arith.constant 0 : index
    %32 = vector.load %arg10[%c0_23, %c0_24] : memref<1x256xf32, #tpu.memory_space<vmem>>, vector<1x256xf32>
    %33 = vector.broadcast %32 : vector<1x256xf32> to vector<8x256xf32>
    %34 = arith.mulf %24, %33 : vector<8x256xf32>
    %cst_25 = arith.constant dense<0.000000e+00> : vector<8xf32>
    %35 = vector.multi_reduction <add>, %34, %cst_25 [1] : vector<8x256xf32> to vector<8xf32>
    %36 = vector.shape_cast %35 : vector<8xf32> to vector<8x1xf32>
    %c0_26 = arith.constant 0 : index
    %c0_27 = arith.constant 0 : index
    %37 = vector.load %arg11[%c0_26, %c0_27] : memref<1x256xf32, #tpu.memory_space<vmem>>, vector<1x256xf32>
    %38 = vector.broadcast %37 : vector<1x256xf32> to vector<8x256xf32>
    %39 = arith.mulf %31, %38 : vector<8x256xf32>
    %cst_28 = arith.constant dense<0.000000e+00> : vector<8xf32>
    %40 = vector.multi_reduction <add>, %39, %cst_28 [1] : vector<8x256xf32> to vector<8xf32>
    %41 = vector.shape_cast %40 : vector<8xf32> to vector<8x1xf32>
    %42 = tpu.iota {dimensions = array<i32: 1>} : vector<8x2xi32>
    %c0_i32 = arith.constant 0 : i32
    %43 = vector.broadcast %c0_i32 : i32 to vector<8x2xi32>
    %44 = arith.cmpi eq, %42, %43 : vector<8x2xi32>
    %45 = vector.shape_cast %36 : vector<8x1xf32> to vector<8x1xf32>
    %46 = vector.broadcast %45 : vector<8x1xf32> to vector<8x2xf32>
    %47 = vector.shape_cast %41 : vector<8x1xf32> to vector<8x1xf32>
    %48 = vector.broadcast %47 : vector<8x1xf32> to vector<8x2xf32>
    %49 = arith.select %44, %46, %48 : vector<8x2xi1>, vector<8x2xf32>
    %c0_29 = arith.constant 0 : index
    %c0_30 = arith.constant 0 : index
    %50 = vector.load %arg12[%c0_29, %c0_30] : memref<1x2xf32, #tpu.memory_space<vmem>>, vector<1x2xf32>
    %51 = vector.broadcast %50 : vector<1x2xf32> to vector<8x2xf32>
    %52 = arith.addf %49, %51 : vector<8x2xf32>
    %c0_31 = arith.constant 0 : index
    %c0_32 = arith.constant 0 : index
    %53 = vector.load %arg13[%c0_31, %c0_32] : memref<8x2xf32, #tpu.memory_space<vmem>>, vector<8x2xf32>
    tpu.vector_store %arg13[%c0_31, %c0_32], %52 {strides = array<i32>} : memref<8x2xf32, #tpu.memory_space<vmem>>, vector<8x2xf32>,
    return
  }
  func.func @transform_0(%arg0: i32) -> (i32, i32) {
    %c0_i32 = arith.constant 0 : i32
    %c0_i32_0 = arith.constant 0 : i32
    return %arg0, %c0_i32 : i32, i32
  }
  func.func @transform_1(%arg0: i32) -> (i32, i32) {
    %c0_i32 = arith.constant 0 : i32
    %c0_i32_0 = arith.constant 0 : i32
    return %arg0, %c0_i32 : i32, i32
  }
  func.func @transform_2(%arg0: i32) -> (i32, i32) {
    %c0_i32 = arith.constant 0 : i32
    %c0_i32_0 = arith.constant 0 : i32
    %c0_i32_1 = arith.constant 0 : i32
    return %c0_i32, %c0_i32_0 : i32, i32
  }
  func.func @transform_3(%arg0: i32) -> (i32, i32) {
    %c0_i32 = arith.constant 0 : i32
    %c0_i32_0 = arith.constant 0 : i32
    %c0_i32_1 = arith.constant 0 : i32
    return %c0_i32, %c0_i32_0 : i32, i32
  }
  func.func @transform_4(%arg0: i32) -> (i32, i32) {
    %c0_i32 = arith.constant 0 : i32
    %c0_i32_0 = arith.constant 0 : i32
    %c0_i32_1 = arith.constant 0 : i32
    return %c0_i32, %c0_i32_0 : i32, i32
  }
  func.func @transform_5(%arg0: i32) -> (i32, i32) {
    %c0_i32 = arith.constant 0 : i32
    %c0_i32_0 = arith.constant 0 : i32
    %c0_i32_1 = arith.constant 0 : i32
    return %c0_i32, %c0_i32_0 : i32, i32
  }
  func.func @transform_6(%arg0: i32) -> (i32, i32) {
    %c0_i32 = arith.constant 0 : i32
    %c0_i32_0 = arith.constant 0 : i32
    %c0_i32_1 = arith.constant 0 : i32
    return %c0_i32, %c0_i32_0 : i32, i32
  }
  func.func @transform_7(%arg0: i32) -> (i32, i32) {
    %c0_i32 = arith.constant 0 : i32
    %c0_i32_0 = arith.constant 0 : i32
    %c0_i32_1 = arith.constant 0 : i32
    return %c0_i32, %c0_i32_0 : i32, i32
  }
  func.func @transform_8(%arg0: i32) -> (i32, i32) {
    %c0_i32 = arith.constant 0 : i32
    %c0_i32_0 = arith.constant 0 : i32
    %c0_i32_1 = arith.constant 0 : i32
    return %c0_i32, %c0_i32_0 : i32, i32
  }
  func.func @transform_9(%arg0: i32) -> (i32, i32) {
    %c0_i32 = arith.constant 0 : i32
    %c0_i32_0 = arith.constant 0 : i32
    %c0_i32_1 = arith.constant 0 : i32
    return %c0_i32, %c0_i32_0 : i32, i32
  }
  func.func @transform_10(%arg0: i32) -> (i32, i32) {
    %c0_i32 = arith.constant 0 : i32
    %c0_i32_0 = arith.constant 0 : i32
    %c0_i32_1 = arith.constant 0 : i32
    return %c0_i32, %c0_i32_0 : i32, i32
  }
  func.func @transform_11(%arg0: i32) -> (i32, i32) {
    %c0_i32 = arith.constant 0 : i32
    %c0_i32_0 = arith.constant 0 : i32
    %c0_i32_1 = arith.constant 0 : i32
    return %c0_i32, %c0_i32_0 : i32, i32
  }
  func.func @transform_12(%arg0: i32) -> (i32, i32) {
    %c0_i32 = arith.constant 0 : i32
    %c0_i32_0 = arith.constant 0 : i32
    return %arg0, %c0_i32 : i32, i32
  }
}

</mosaic_0001>

<llo_original>
// kernel: critic_forward.1
$region0: #{critic_forward.1}
  #allocation0 [shape = 'u32[]', space=smem, size = 0x4, offset = 0x4, fixed_abs, tag = 'smem constant byte address 0x4 - core index']
  #allocation1 [shape = 'u32[144,128]{1,0:T(1,128)}', space=vmem, size = 0x12000, scoped, tag = 'internal scratch']
  %s0 = inlined_call_operand.hbm [shape: f32[8,12], index: 0, kind: input, shape index: {}]
  %s1 = inlined_call_operand.vmem [shape: f32[8,4], index: 1, kind: input, shape index: {}]
  %s2 = inlined_call_operand.vmem [shape: bf16[12,512], index: 2, kind: input, shape index: {}]
  %s3 = inlined_call_operand.hbm [shape: bf16[4,512], index: 3, kind: input, shape index: {}]
  %s4 = inlined_call_operand.vmem [shape: f32[1,512], index: 4, kind: input, shape index: {}]
  %s5 = inlined_call_operand.hbm [shape: bf16[256,256], index: 5, kind: input, shape index: {}]
  %s6 = inlined_call_operand.vmem [shape: f32[1,256], index: 6, kind: input, shape index: {}]
  %s7 = inlined_call_operand.hbm [shape: bf16[256,256], index: 7, kind: input, shape index: {}]
  %s8 = inlined_call_operand.hbm [shape: f32[1,256], index: 8, kind: input, shape index: {}]
  %s9 = inlined_call_operand.vmem [shape: f32[1,256], index: 9, kind: input, shape index: {}]
  %s10 = inlined_call_operand.vmem [shape: f32[1,256], index: 10, kind: input, shape index: {}]
  %s11 = inlined_call_operand.hbm [shape: f32[1,2], index: 11, kind: input, shape index: {}]
  %s12 = inlined_call_operand.vmem [shape: f32[8,2], index: 12, kind: output, shape index: {}]
  %s13 = sld [smem:[#allocation0]]
  $region82: #{critic_forward.1} parent=0
    _
  %s15 = ssub.s32 1, %s13
  %s16 = scalar_select 0, %s15, %s13
  $region1: #{critic_forward.1} parent=0
    #allocation2 [shape = 'u8[4096]{0}', space=vmem, size = 0x1000, scoped, tag = 'input window, operand 0, single buffered']
    #allocation3 [shape = 's32[1]{0}', space=sflag, size = 0x4, scoped, tag = 'scoped memory for critic_forward.1']
    #allocation4 [shape = 'u8[4096]{0}', space=vmem, size = 0x1000, scoped, tag = 'input window, operand 3, single buffered']
    #allocation5 [shape = 's32[1]{0}', space=sflag, size = 0x4, scoped, tag = 'scoped memory for critic_forward.1']
    #allocation6 [shape = 'u8[131072]{0}', space=vmem, size = 0x20000, scoped, tag = 'input window, operand 5, single buffered']
    #allocation7 [shape = 'u8[131072]{0}', space=vmem, size = 0x20000, scoped, tag = 'input window, operand 7, single buffered']
    #allocation8 [shape = 's32[1]{0}', space=sflag, size = 0x4, scoped, tag = 'scoped memory for critic_forward.1']
    #allocation9 [shape = 'u8[1024]{0}', space=vmem, size = 0x400, scoped, tag = 'input window, operand 8, single buffered']
    #allocation10 [shape = 'u8[512]{0}', space=vmem, size = 0x400, scoped, tag = 'input window, operand 11, single buffered']
    #allocation11 [shape = 's32[1]{0}', space=sflag, size = 0x4, scoped, tag = 'scoped memory for critic_forward.1']
    %17 = vsyncpa [#allocation3], 0
    %18 = vsyncpa [#allocation5], 0
    %19 = vsyncpa [#allocation8], 0
    %20 = vsyncpa [#allocation11], 0
    // Predicated region
    $region2: #{critic_forward.1} parent=1 // pred_check
      _
    $region3: #{critic_forward.1} parent=1 // pred_check_branch
      %22 = sbr.rel (0) target = $region5
    $region4: #{critic_forward.1} parent=1 // pred_region
      %s24 = ssub.s32 128, 128
      %25 = vsyncadd [#allocation3], %s24
      %s27 = sshll.u32 [#allocation2], 4
      %s28 = int_to_ptr.vmem [resolvable:$true] %s27
      %30 = dma.hbm_to_vmem [thread:$0]  %s0, 128, %s28, [#allocation3]
    $region5: #{critic_forward.1} parent=1 // pred_fallthru
      _
    // Predicated region
    $region6: #{critic_forward.1} parent=1 // pred_check
      _
    $region7: #{critic_forward.1} parent=1 // pred_check_branch
      %32 = sbr.rel (0) target = $region9
    $region8: #{critic_forward.1} parent=1 // pred_region
      _
    $region9: #{critic_forward.1} parent=1 // pred_fallthru
      _
    // Predicated region
    $region10: #{critic_forward.1} parent=1 // pred_check
      _
    $region11: #{critic_forward.1} parent=1 // pred_check_branch
      %34 = sbr.rel (0) target = $region13
    $region12: #{critic_forward.1} parent=1 // pred_region
      _
    $region13: #{critic_forward.1} parent=1 // pred_fallthru
      _
    // Predicated region
    $region14: #{critic_forward.1} parent=1 // pred_check
      _
    $region15: #{critic_forward.1} parent=1 // pred_check_branch
      %36 = sbr.rel (0) target = $region17
    $region16: #{critic_forward.1} parent=1 // pred_region
      %s38 = ssub.s32 128, 128
      %39 = vsyncadd [#allocation5], %s38
      %s41 = sshll.u32 [#allocation4], 4
      %s42 = int_to_ptr.vmem [resolvable:$true] %s41
      %44 = dma.hbm_to_vmem [thread:$0]  %s3, 128, %s42, [#allocation5]
    $region17: #{critic_forward.1} parent=1 // pred_fallthru
      _
    // Predicated region
    $region18: #{critic_forward.1} parent=1 // pred_check
      _
    $region19: #{critic_forward.1} parent=1 // pred_check_branch
      %46 = sbr.rel (0) target = $region21
    $region20: #{critic_forward.1} parent=1 // pred_region
      _
    $region21: #{critic_forward.1} parent=1 // pred_fallthru
      _
    // Predicated region
    $region22: #{critic_forward.1} parent=1 // pred_check
      _
    $region23: #{critic_forward.1} parent=1 // pred_check_branch
      %48 = sbr.rel (0) target = $region25
    $region24: #{critic_forward.1} parent=1 // pred_region
      %s50 = ssub.s32 4096, 4096
      %51 = vsyncadd [#allocation5], %s50
      %s52 = sshll.u32 [#allocation6], 4
      %s53 = int_to_ptr.vmem [resolvable:$true] %s52
      %58 = dma.hbm_to_vmem [thread:$0]  %s5, 4096, %s53, [#allocation5], 128, 128, 8
    $region25: #{critic_forward.1} parent=1 // pred_fallthru
      _
    // Predicated region
    $region26: #{critic_forward.1} parent=1 // pred_check
      _
    $region27: #{critic_forward.1} parent=1 // pred_check_branch
      %60 = sbr.rel (0) target = $region29
    $region28: #{critic_forward.1} parent=1 // pred_region
      _
    $region29: #{critic_forward.1} parent=1 // pred_fallthru
      _
    // Predicated region
    $region30: #{critic_forward.1} parent=1 // pred_check
      _
    $region31: #{critic_forward.1} parent=1 // pred_check_branch
      %62 = sbr.rel (0) target = $region33
    $region32: #{critic_forward.1} parent=1 // pred_region
      %s64 = ssub.s32 4096, 4096
      %65 = vsyncadd [#allocation8], %s64
      %s66 = sshll.u32 [#allocation7], 4
      %s67 = int_to_ptr.vmem [resolvable:$true] %s66
      %72 = dma.hbm_to_vmem [thread:$0]  %s7, 4096, %s67, [#allocation8], 128, 128, 8
    $region33: #{critic_forward.1} parent=1 // pred_fallthru
      _
    // Predicated region
    $region34: #{critic_forward.1} parent=1 // pred_check
      _
    $region35: #{critic_forward.1} parent=1 // pred_check_branch
      %74 = sbr.rel (0) target = $region37
    $region36: #{critic_forward.1} parent=1 // pred_region
      %s76 = ssub.s32 32, 32
      %77 = vsyncadd [#allocation8], %s76
      %s79 = sshll.u32 [#allocation9], 4
      %s80 = int_to_ptr.vmem [resolvable:$true] %s79
      %82 = dma.hbm_to_vmem [thread:$0]  %s8, 32, %s80, [#allocation8]
    $region37: #{critic_forward.1} parent=1 // pred_fallthru
      _
    // Predicated region
    $region38: #{critic_forward.1} parent=1 // pred_check
      _
    $region39: #{critic_forward.1} parent=1 // pred_check_branch
      %84 = sbr.rel (0) target = $region41
    $region40: #{critic_forward.1} parent=1 // pred_region
      _
    $region41: #{critic_forward.1} parent=1 // pred_fallthru
      _
    // Predicated region
    $region42: #{critic_forward.1} parent=1 // pred_check
      _
    $region43: #{critic_forward.1} parent=1 // pred_check_branch
      %86 = sbr.rel (0) target = $region45
    $region44: #{critic_forward.1} parent=1 // pred_region
      _
    $region45: #{critic_forward.1} parent=1 // pred_fallthru
      _
    // Predicated region
    $region46: #{critic_forward.1} parent=1 // pred_check
      _
    $region47: #{critic_forward.1} parent=1 // pred_check_branch
      %88 = sbr.rel (0) target = $region49
    $region48: #{critic_forward.1} parent=1 // pred_region
      %s90 = ssub.s32 16, 16
      %91 = vsyncadd [#allocation11], %s90
      %s93 = sshll.u32 [#allocation10], 4
      %s94 = int_to_ptr.vmem [resolvable:$true] %s93
      %96 = dma.hbm_to_vmem [thread:$0]  %s11, 16, %s94, [#allocation11]
    $region49: #{critic_forward.1} parent=1 // pred_fallthru
      _
    // Predicated region
    $region50: #{critic_forward.1} parent=1 // pred_check
      _
    $region51: #{critic_forward.1} parent=1 // pred_check_branch
      %98 = sbr.rel (0) target = $region53
    $region52: #{critic_forward.1} parent=1 // pred_region
      %99 = dma.done [#allocation3], 128
    $region53: #{critic_forward.1} parent=1 // pred_fallthru
      _
    // Predicated region
    $region54: #{critic_forward.1} parent=1 // pred_check
      _
    $region55: #{critic_forward.1} parent=1 // pred_check_branch
      %101 = sbr.rel (0) target = $region57
    $region56: #{critic_forward.1} parent=1 // pred_region
      %102 = dma.done [#allocation5], 128
    $region57: #{critic_forward.1} parent=1 // pred_fallthru
      _
    // Predicated region
    $region58: #{critic_forward.1} parent=1 // pred_check
      _
    $region59: #{critic_forward.1} parent=1 // pred_check_branch
      %104 = sbr.rel (0) target = $region61
    $region60: #{critic_forward.1} parent=1 // pred_region
      %105 = dma.done [#allocation5], 4096
    $region61: #{critic_forward.1} parent=1 // pred_fallthru
      _
    // Predicated region
    $region62: #{critic_forward.1} parent=1 // pred_check
      _
    $region63: #{critic_forward.1} parent=1 // pred_check_branch
      %107 = sbr.rel (0) target = $region65
    $region64: #{critic_forward.1} parent=1 // pred_region
      %108 = dma.done [#allocation8], 4096
    $region65: #{critic_forward.1} parent=1 // pred_fallthru
      _
    // Predicated region
    $region66: #{critic_forward.1} parent=1 // pred_check
      _
    $region67: #{critic_forward.1} parent=1 // pred_check_branch
      %110 = sbr.rel (0) target = $region69
    $region68: #{critic_forward.1} parent=1 // pred_region
      %111 = dma.done [#allocation8], 32
    $region69: #{critic_forward.1} parent=1 // pred_fallthru
      _
    // Predicated region
    $region70: #{critic_forward.1} parent=1 // pred_check
      _
    $region71: #{critic_forward.1} parent=1 // pred_check_branch
      %113 = sbr.rel (0) target = $region73
    $region72: #{critic_forward.1} parent=1 // pred_region
      %114 = dma.done [#allocation11], 16
    $region73: #{critic_forward.1} parent=1 // pred_fallthru
      _
    %v116 = vld [vmem:[#allocation2] sm:$0xff]
    %v117 = vpack.c.bf16 %v116, %v116
    %v118 = vld [vmem:[%s1] sm:$0xff]
    %v119 = vpack.c.bf16 %v118, %v118
    %v120 = vld [vmem:[%s2] sm:$0xff]
    %v121 = vld [vmem:[%s2 + $0x8] sm:$0xff]
    %v122 = vld [vmem:[%s2 + $0x10] sm:$0x33]
    %v123 = vld [vmem:[%s2 + $0x18] sm:$0x33]
    %v124 = vld [vmem:[#allocation4] sm:$0xff]
    %v126 = vcombine.high %v124, %v124
    %v128 = vunpack.c.l.s4 1983009808
    %v129 = vunpack.c.0.s8 %v128
    %v130 = vlaneseq
    %v131 = vshrl.u32 %v130, 7
    %v132 = vsub.s32 %v129, %v131
    %v133 = vrot.slane %v124, %v132
    %v135 = vunpack.c.l.s4 1983009808
    %v136 = vunpack.c.0.s8 %v135
    %v137 = vlaneseq
    %v138 = vshrl.u32 %v137, 7
    %v139 = vsub.s32 %v136, %v138
    %v140 = vrot.slane %v126, %v139
    %v141 = vcombine.high %v133, %v133
    %v142 = vcombine.high %v140, %v140
    %vm143 = vcmask 31744
    %v145 = vsel %vm143, %v119, 0
    %vm147 = vcmask 1041408
    %v149 = vsel %vm147, %v133, 0
    %v152 = vsel %vm147, %v141, 0
    %v155 = vsel %vm147, %v140, 0
    %v158 = vsel %vm147, %v142, 0
    %160 = vmatprep.subr.bf16.mxu0 %v152
    %161 = vmatpush1.bf16.msra.mxu0 %v149
    %162 = vmatprep.subr.bf16.mxu0 0
    %163 = vmatpush1.bf16.msra.mxu0 0
    %164 = vmatprep.subr.bf16.mxu0 0
    %165 = vmatpush1.bf16.msra.mxu0 0
    %166 = vmatprep.subr.bf16.mxu0 0
    %167 = vmatpush1.bf16.msra.mxu0 0
    %168 = vmatprep.subr.bf16.mxu0 0
    %169 = vmatpush1.bf16.msra.mxu0 0
    %170 = vmatprep.subr.bf16.mxu0 0
    %171 = vmatpush1.bf16.msra.mxu0 0
    %172 = vmatprep.subr.bf16.mxu0 0
    %173 = vmatpush1.bf16.msra.mxu0 0
    %174 = vmatprep.subr.bf16.mxu0 0
    %175 = vmatpush1.bf16.msra.mxu0 0
    %176 = vmatprep.subr.bf16.mxu0 0
    %177 = vmatpush1.bf16.msra.mxu0 0
    %178 = vmatprep.subr.bf16.mxu0 0
    %179 = vmatpush1.bf16.msra.mxu0 0
    %180 = vmatprep.subr.bf16.mxu0 0
    %181 = vmatpush1.bf16.msra.mxu0 0
    %182 = vmatprep.subr.bf16.mxu0 0
    %183 = vmatpush1.bf16.msra.mxu0 0
    %184 = vmatprep.subr.bf16.mxu0 0
    %185 = vmatpush1.bf16.msra.mxu0 0
    %186 = vmatprep.subr.bf16.mxu0 0
    %187 = vmatpush1.bf16.msra.mxu0 0
    %188 = vmatprep.subr.bf16.mxu0 0
    %189 = vmatpush1.bf16.msra.mxu0 0
    %190 = vmatprep.subr.bf16.mxu0 0
    %191 = vmatpush1.bf16.msra.mxu0 0
    %192 = vmatprep.mubr.bf16.mxu0 0
    %193 = vmatmul.mubr.bf16.gmra.mrb[0].mxu0 %v145
    %v194 = vpop.f32.mrb[0].mxu0
    %v195 = vadd.f32 0.0, %v194
    %v196 = vpop.f32.mrb[0].mxu0
    %v197 = vadd.f32 0.0, %v196
    %v198 = vpop.f32.mrb[0].mxu0
    %v199 = vpop.f32.mrb[0].mxu0
    %200 = vdwg.mxu0
    %201 = vmatprep.subr.bf16.mxu0 %v158
    %202 = vmatpush1.bf16.msra.mxu0 %v155
    %203 = vmatprep.subr.bf16.mxu0 0
    %204 = vmatpush1.bf16.msra.mxu0 0
    %205 = vmatprep.subr.bf16.mxu0 0
    %206 = vmatpush1.bf16.msra.mxu0 0
    %207 = vmatprep.subr.bf16.mxu0 0
    %208 = vmatpush1.bf16.msra.mxu0 0
    %209 = vmatprep.subr.bf16.mxu0 0
    %210 = vmatpush1.bf16.msra.mxu0 0
    %211 = vmatprep.subr.bf16.mxu0 0
    %212 = vmatpush1.bf16.msra.mxu0 0
    %213 = vmatprep.subr.bf16.mxu0 0
    %214 = vmatpush1.bf16.msra.mxu0 0
    %215 = vmatprep.subr.bf16.mxu0 0
    %216 = vmatpush1.bf16.msra.mxu0 0
    %217 = vmatprep.subr.bf16.mxu0 0
    %218 = vmatpush1.bf16.msra.mxu0 0
    %219 = vmatprep.subr.bf16.mxu0 0
    %220 = vmatpush1.bf16.msra.mxu0 0
    %221 = vmatprep.subr.bf16.mxu0 0
    %222 = vmatpush1.bf16.msra.mxu0 0
    %223 = vmatprep.subr.bf16.mxu0 0
    %224 = vmatpush1.bf16.msra.mxu0 0
    %225 = vmatprep.subr.bf16.mxu0 0
    %226 = vmatpush1.bf16.msra.mxu0 0
    %227 = vmatprep.subr.bf16.mxu0 0
    %228 = vmatpush1.bf16.msra.mxu0 0
    %229 = vmatprep.subr.bf16.mxu0 0
    %230 = vmatpush1.bf16.msra.mxu0 0
    %231 = vmatprep.subr.bf16.mxu0 0
    %232 = vmatpush1.bf16.msra.mxu0 0
    %233 = vmatprep.mubr.bf16.mxu0 0
    %234 = vmatmul.mubr.bf16.gmra.mrb[0].mxu0 %v145
    %v235 = vpop.f32.mrb[0].mxu0
    %v236 = vadd.f32 0.0, %v235
    %v237 = vpop.f32.mrb[0].mxu0
    %v238 = vadd.f32 0.0, %v237
    %v239 = vpop.f32.mrb[0].mxu0
    %v240 = vpop.f32.mrb[0].mxu0
    %241 = vdwg.mxu0
    %v246 = vunpack.c.l.b16 %v120
    %v247 = vunpack.c.h.b16 %v120
    %v248 = vunpack.c.l.b16 %v121
    %v249 = vunpack.c.h.b16 %v121
    %v250 = vunpack.c.l.b16 %v122
    %v251 = vunpack.c.h.b16 %v122
    %v252 = vunpack.c.l.b16 %v123
    %v253 = vunpack.c.h.b16 %v123
    %v254 = vpack.c.b16 %v250, %v246
    %v255 = vpack.c.b16 %v251, %v247
    %v256 = vpack.c.b16 %v252, %v248
    %v257 = vpack.c.b16 %v253, %v249
    %vm258 = vcmask 97280
    %v260 = vsel %vm258, %v117, 0
    %vm262 = vcmask 1045504
    %v264 = vsel %vm262, %v254, 0
    %v267 = vsel %vm262, %v255, 0
    %v270 = vsel %vm262, %v256, 0
    %v273 = vsel %vm262, %v257, 0
    %275 = vmatprep.subr.bf16.mxu0 %v267
    %276 = vmatpush1.bf16.msra.mxu0 %v264
    %277 = vmatprep.subr.bf16.mxu0 0
    %278 = vmatpush1.bf16.msra.mxu0 0
    %279 = vmatprep.subr.bf16.mxu0 0
    %280 = vmatpush1.bf16.msra.mxu0 0
    %281 = vmatprep.subr.bf16.mxu0 0
    %282 = vmatpush1.bf16.msra.mxu0 0
    %283 = vmatprep.subr.bf16.mxu0 0
    %284 = vmatpush1.bf16.msra.mxu0 0
    %285 = vmatprep.subr.bf16.mxu0 0
    %286 = vmatpush1.bf16.msra.mxu0 0
    %287 = vmatprep.subr.bf16.mxu0 0
    %288 = vmatpush1.bf16.msra.mxu0 0
    %289 = vmatprep.subr.bf16.mxu0 0
    %290 = vmatpush1.bf16.msra.mxu0 0
    %291 = vmatprep.subr.bf16.mxu0 0
    %292 = vmatpush1.bf16.msra.mxu0 0
    %293 = vmatprep.subr.bf16.mxu0 0
    %294 = vmatpush1.bf16.msra.mxu0 0
    %295 = vmatprep.subr.bf16.mxu0 0
    %296 = vmatpush1.bf16.msra.mxu0 0
    %297 = vmatprep.subr.bf16.mxu0 0
    %298 = vmatpush1.bf16.msra.mxu0 0
    %299 = vmatprep.subr.bf16.mxu0 0
    %300 = vmatpush1.bf16.msra.mxu0 0
    %301 = vmatprep.subr.bf16.mxu0 0
    %302 = vmatpush1.bf16.msra.mxu0 0
    %303 = vmatprep.subr.bf16.mxu0 0
    %304 = vmatpush1.bf16.msra.mxu0 0
    %305 = vmatprep.subr.bf16.mxu0 0
    %306 = vmatpush1.bf16.msra.mxu0 0
    %307 = vmatprep.mubr.bf16.mxu0 0
    %308 = vmatmul.mubr.bf16.gmra.mrb[0].mxu0 %v260
    %v309 = vpop.f32.mrb[0].mxu0
    %v310 = vadd.f32 %v195, %v309
    %v311 = vpop.f32.mrb[0].mxu0
    %v312 = vadd.f32 %v197, %v311
    %v313 = vpop.f32.mrb[0].mxu0
    %v314 = vpop.f32.mrb[0].mxu0
    %315 = vdwg.mxu0
    %316 = vmatprep.subr.bf16.mxu0 %v273
    %317 = vmatpush1.bf16.msra.mxu0 %v270
    %318 = vmatprep.subr.bf16.mxu0 0
    %319 = vmatpush1.bf16.msra.mxu0 0
    %320 = vmatprep.subr.bf16.mxu0 0
    %321 = vmatpush1.bf16.msra.mxu0 0
    %322 = vmatprep.subr.bf16.mxu0 0
    %323 = vmatpush1.bf16.msra.mxu0 0
    %324 = vmatprep.subr.bf16.mxu0 0
    %325 = vmatpush1.bf16.msra.mxu0 0
    %326 = vmatprep.subr.bf16.mxu0 0
    %327 = vmatpush1.bf16.msra.mxu0 0
    %328 = vmatprep.subr.bf16.mxu0 0
    %329 = vmatpush1.bf16.msra.mxu0 0
    %330 = vmatprep.subr.bf16.mxu0 0
    %331 = vmatpush1.bf16.msra.mxu0 0
    %332 = vmatprep.subr.bf16.mxu0 0
    %333 = vmatpush1.bf16.msra.mxu0 0
    %334 = vmatprep.subr.bf16.mxu0 0
    %335 = vmatpush1.bf16.msra.mxu0 0
    %336 = vmatprep.subr.bf16.mxu0 0
    %337 = vmatpush1.bf16.msra.mxu0 0
    %338 = vmatprep.subr.bf16.mxu0 0
    %339 = vmatpush1.bf16.msra.mxu0 0
    %340 = vmatprep.subr.bf16.mxu0 0
    %341 = vmatpush1.bf16.msra.mxu0 0
    %342 = vmatprep.subr.bf16.mxu0 0
    %343 = vmatpush1.bf16.msra.mxu0 0
    %344 = vmatprep.subr.bf16.mxu0 0
    %345 = vmatpush1.bf16.msra.mxu0 0
    %346 = vmatprep.subr.bf16.mxu0 0
    %347 = vmatpush1.bf16.msra.mxu0 0
    %348 = vmatprep.mubr.bf16.mxu0 0
    %349 = vmatmul.mubr.bf16.gmra.mrb[0].mxu0 %v260
    %v350 = vpop.f32.mrb[0].mxu0
    %v351 = vadd.f32 %v236, %v350
    %v352 = vpop.f32.mrb[0].mxu0
    %v353 = vadd.f32 %v238, %v352
    %v354 = vpop.f32.mrb[0].mxu0
    %v355 = vpop.f32.mrb[0].mxu0
    %356 = vdwg.mxu0
    %v357 = vld [vmem:[%s4] sm:$0xf]
    %v359 = vlaneseq
    %v360 = vshrl.u32 %v359, 7
    %v361 = vsub.s32 0, %v360
    %v362 = vrot.slane %v357, %v361
    %v363 = vlaneseq
    %v364 = vshrl.u32 %v363, 7
    %v365 = vsub.s32 1, %v364
    %v366 = vrot.slane %v357, %v365
    %v367 = vlaneseq
    %v368 = vshrl.u32 %v367, 7
    %v369 = vsub.s32 2, %v368
    %v370 = vrot.slane %v357, %v369
    %v371 = vlaneseq
    %v372 = vshrl.u32 %v371, 7
    %v373 = vsub.s32 3, %v372
    %v374 = vrot.slane %v357, %v373
    %v379 = vadd.f32 %v310, %v362
    %v380 = vadd.f32 %v312, %v366
    %v381 = vadd.f32 %v351, %v370
    %v382 = vadd.f32 %v353, %v374
    %v383 = vmax.f32 %v379, 0.0
    %v384 = vmax.f32 %v380, 0.0
    %v385 = vmax.f32 %v381, 0.0
    %v386 = vmax.f32 %v382, 0.0
    %v387 = vpack.c.bf16 %v383, %v383
    %v388 = vpack.c.bf16 %v384, %v384
    %v389 = vpack.c.bf16 %v385, %v385
    %v390 = vpack.c.bf16 %v386, %v386
    %v391 = vld [vmem:[#allocation6] sm:$0xff]
    %v392 = vld [vmem:[#allocation6 + $0x8] sm:$0xff]
    %v393 = vld [vmem:[#allocation6 + $0x10] sm:$0xff]
    %v394 = vld [vmem:[#allocation6 + $0x18] sm:$0xff]
    %v395 = vld [vmem:[#allocation6 + $0x20] sm:$0xff]
    %v396 = vld [vmem:[#allocation6 + $0x28] sm:$0xff]
    %v397 = vld [vmem:[#allocation6 + $0x30] sm:$0xff]
    %v398 = vld [vmem:[#allocation6 + $0x38] sm:$0xff]
    %v399 = vld [vmem:[#allocation6 + $0x40] sm:$0xff]
    %v400 = vld [vmem:[#allocation6 + $0x48] sm:$0xff]
    %v401 = vld [vmem:[#allocation6 + $0x50] sm:$0xff]
    %v402 = vld [vmem:[#allocation6 + $0x58] sm:$0xff]
    %v403 = vld [vmem:[#allocation6 + $0x60] sm:$0xff]
    %v404 = vld [vmem:[#allocation6 + $0x68] sm:$0xff]
    %v405 = vld [vmem:[#allocation6 + $0x70] sm:$0xff]
    %v406 = vld [vmem:[#allocation6 + $0x78] sm:$0xff]
    %v407 = vld [vmem:[#allocation6 + $0x80] sm:$0xff]
    %v408 = vld [vmem:[#allocation6 + $0x88] sm:$0xff]
    %v409 = vld [vmem:[#allocation6 + $0x90] sm:$0xff]
    %v410 = vld [vmem:[#allocation6 + $0x98] sm:$0xff]
    %v411 = vld [vmem:[#allocation6 + $0xa0] sm:$0xff]
    %v412 = vld [vmem:[#allocation6 + $0xa8] sm:$0xff]
    %v413 = vld [vmem:[#allocation6 + $0xb0] sm:$0xff]
    %v414 = vld [vmem:[#allocation6 + $0xb8] sm:$0xff]
    %v415 = vld [vmem:[#allocation6 + $0xc0] sm:$0xff]
    %v416 = vld [vmem:[#allocation6 + $0xc8] sm:$0xff]
    %v417 = vld [vmem:[#allocation6 + $0xd0] sm:$0xff]
    %v418 = vld [vmem:[#allocation6 + $0xd8] sm:$0xff]
    %v419 = vld [vmem:[#allocation6 + $0xe0] sm:$0xff]
    %v420 = vld [vmem:[#allocation6 + $0xe8] sm:$0xff]
    %v421 = vld [vmem:[#allocation6 + $0xf0] sm:$0xff]
    %v422 = vld [vmem:[#allocation6 + $0xf8] sm:$0xff]
    %v423 = vld [vmem:[%s6] sm:$0x3]
    %v425 = vlaneseq
    %v426 = vshrl.u32 %v425, 7
    %v427 = vsub.s32 0, %v426
    %v428 = vrot.slane %v423, %v427
    %v429 = vlaneseq
    %v430 = vshrl.u32 %v429, 7
    %v431 = vsub.s32 1, %v430
    %v432 = vrot.slane %v423, %v431
    %v467 = vunpack.c.l.b16 %v391
    %v468 = vunpack.c.h.b16 %v391
    %v469 = vunpack.c.l.b16 %v392
    %v470 = vunpack.c.h.b16 %v392
    %v471 = vunpack.c.l.b16 %v393
    %v472 = vunpack.c.h.b16 %v393
    %v473 = vunpack.c.l.b16 %v394
    %v474 = vunpack.c.h.b16 %v394
    %v475 = vunpack.c.l.b16 %v395
    %v476 = vunpack.c.h.b16 %v395
    %v477 = vunpack.c.l.b16 %v396
    %v478 = vunpack.c.h.b16 %v396
    %v479 = vunpack.c.l.b16 %v397
    %v480 = vunpack.c.h.b16 %v397
    %v481 = vunpack.c.l.b16 %v398
    %v482 = vunpack.c.h.b16 %v398
    %v483 = vunpack.c.l.b16 %v399
    %v484 = vunpack.c.h.b16 %v399
    %v485 = vunpack.c.l.b16 %v400
    %v486 = vunpack.c.h.b16 %v400
    %v487 = vunpack.c.l.b16 %v401
    %v488 = vunpack.c.h.b16 %v401
    %v489 = vunpack.c.l.b16 %v402
    %v490 = vunpack.c.h.b16 %v402
    %v491 = vunpack.c.l.b16 %v403
    %v492 = vunpack.c.h.b16 %v403
    %v493 = vunpack.c.l.b16 %v404
    %v494 = vunpack.c.h.b16 %v404
    %v495 = vunpack.c.l.b16 %v405
    %v496 = vunpack.c.h.b16 %v405
    %v497 = vunpack.c.l.b16 %v406
    %v498 = vunpack.c.h.b16 %v406
    %v499 = vunpack.c.l.b16 %v407
    %v500 = vunpack.c.h.b16 %v407
    %v501 = vunpack.c.l.b16 %v408
    %v502 = vunpack.c.h.b16 %v408
    %v503 = vunpack.c.l.b16 %v409
    %v504 = vunpack.c.h.b16 %v409
    %v505 = vunpack.c.l.b16 %v410
    %v506 = vunpack.c.h.b16 %v410
    %v507 = vunpack.c.l.b16 %v411
    %v508 = vunpack.c.h.b16 %v411
    %v509 = vunpack.c.l.b16 %v412
    %v510 = vunpack.c.h.b16 %v412
    %v511 = vunpack.c.l.b16 %v413
    %v512 = vunpack.c.h.b16 %v413
    %v513 = vunpack.c.l.b16 %v414
    %v514 = vunpack.c.h.b16 %v414
    %v515 = vunpack.c.l.b16 %v415
    %v516 = vunpack.c.h.b16 %v415
    %v517 = vunpack.c.l.b16 %v416
    %v518 = vunpack.c.h.b16 %v416
    %v519 = vunpack.c.l.b16 %v417
    %v520 = vunpack.c.h.b16 %v417
    %v521 = vunpack.c.l.b16 %v418
    %v522 = vunpack.c.h.b16 %v418
    %v523 = vunpack.c.l.b16 %v419
    %v524 = vunpack.c.h.b16 %v419
    %v525 = vunpack.c.l.b16 %v420
    %v526 = vunpack.c.h.b16 %v420
    %v527 = vunpack.c.l.b16 %v421
    %v528 = vunpack.c.h.b16 %v421
    %v529 = vunpack.c.l.b16 %v422
    %v530 = vunpack.c.h.b16 %v422
    %v531 = vpack.c.b16 %v469, %v467
    %v532 = vpack.c.b16 %v470, %v468
    %v533 = vpack.c.b16 %v473, %v471
    %v534 = vpack.c.b16 %v474, %v472
    %v535 = vpack.c.b16 %v477, %v475
    %v536 = vpack.c.b16 %v478, %v476
    %v537 = vpack.c.b16 %v481, %v479
    %v538 = vpack.c.b16 %v482, %v480
    %v539 = vpack.c.b16 %v485, %v483
    %v540 = vpack.c.b16 %v486, %v484
    %v541 = vpack.c.b16 %v489, %v487
    %v542 = vpack.c.b16 %v490, %v488
    %v543 = vpack.c.b16 %v493, %v491
    %v544 = vpack.c.b16 %v494, %v492
    %v545 = vpack.c.b16 %v497, %v495
    %v546 = vpack.c.b16 %v498, %v496
    %v547 = vpack.c.b16 %v501, %v499
    %v548 = vpack.c.b16 %v502, %v500
    %v549 = vpack.c.b16 %v505, %v503
    %v550 = vpack.c.b16 %v506, %v504
    %v551 = vpack.c.b16 %v509, %v507
    %v552 = vpack.c.b16 %v510, %v508
    %v553 = vpack.c.b16 %v513, %v511
    %v554 = vpack.c.b16 %v514, %v512
    %v555 = vpack.c.b16 %v517, %v515
    %v556 = vpack.c.b16 %v518, %v516
    %v557 = vpack.c.b16 %v521, %v519
    %v558 = vpack.c.b16 %v522, %v520
    %v559 = vpack.c.b16 %v525, %v523
    %v560 = vpack.c.b16 %v526, %v524
    %v561 = vpack.c.b16 %v529, %v527
    %v562 = vpack.c.b16 %v530, %v528
    %595 = vmatprep.subr.bf16.mxu0 %v532
    %596 = vmatpush1.bf16.msra.mxu0 %v531
    %597 = vmatprep.subr.bf16.mxu0 %v534
    %598 = vmatpush1.bf16.msra.mxu0 %v533
    %599 = vmatprep.subr.bf16.mxu0 %v536
    %600 = vmatpush1.bf16.msra.mxu0 %v535
    %601 = vmatprep.subr.bf16.mxu0 %v538
    %602 = vmatpush1.bf16.msra.mxu0 %v537
    %603 = vmatprep.subr.bf16.mxu0 %v540
    %604 = vmatpush1.bf16.msra.mxu0 %v539
    %605 = vmatprep.subr.bf16.mxu0 %v542
    %606 = vmatpush1.bf16.msra.mxu0 %v541
    %607 = vmatprep.subr.bf16.mxu0 %v544
    %608 = vmatpush1.bf16.msra.mxu0 %v543
    %609 = vmatprep.subr.bf16.mxu0 %v546
    %610 = vmatpush1.bf16.msra.mxu0 %v545
    %611 = vmatprep.subr.bf16.mxu0 %v548
    %612 = vmatpush1.bf16.msra.mxu0 %v547
    %613 = vmatprep.subr.bf16.mxu0 %v550
    %614 = vmatpush1.bf16.msra.mxu0 %v549
    %615 = vmatprep.subr.bf16.mxu0 %v552
    %616 = vmatpush1.bf16.msra.mxu0 %v551
    %617 = vmatprep.subr.bf16.mxu0 %v554
    %618 = vmatpush1.bf16.msra.mxu0 %v553
    %619 = vmatprep.subr.bf16.mxu0 %v556
    %620 = vmatpush1.bf16.msra.mxu0 %v555
    %621 = vmatprep.subr.bf16.mxu0 %v558
    %622 = vmatpush1.bf16.msra.mxu0 %v557
    %623 = vmatprep.subr.bf16.mxu0 %v560
    %624 = vmatpush1.bf16.msra.mxu0 %v559
    %625 = vmatprep.subr.bf16.mxu0 %v562
    %626 = vmatpush1.bf16.msra.mxu0 %v561
    %627 = vmatprep.mubr.bf16.mxu0 %v388
    %628 = vmatmul.mubr.bf16.gmra.mrb[0].mxu0 %v387
    %v629 = vpop.f32.mrb[0].mxu0
    %v630 = vadd.f32 %v428, %v629
    %v631 = vpop.f32.mrb[0].mxu0
    %v632 = vadd.f32 %v432, %v631
    %v633 = vpop.f32.mrb[0].mxu0
    %v634 = vpop.f32.mrb[0].mxu0
    %635 = vdwg.mxu0
    %v636 = vmax.f32 %v630, 0.0
    %v637 = vmax.f32 %v632, 0.0
    %v638 = vld [vmem:[#allocation7] sm:$0xff]
    %v639 = vld [vmem:[#allocation7 + $0x8] sm:$0xff]
    %v640 = vld [vmem:[#allocation7 + $0x10] sm:$0xff]
    %v641 = vld [vmem:[#allocation7 + $0x18] sm:$0xff]
    %v642 = vld [vmem:[#allocation7 + $0x20] sm:$0xff]
    %v643 = vld [vmem:[#allocation7 + $0x28] sm:$0xff]
    %v644 = vld [vmem:[#allocation7 + $0x30] sm:$0xff]
    %v645 = vld [vmem:[#allocation7 + $0x38] sm:$0xff]
    %v646 = vld [vmem:[#allocation7 + $0x40] sm:$0xff]
    %v647 = vld [vmem:[#allocation7 + $0x48] sm:$0xff]
    %v648 = vld [vmem:[#allocation7 + $0x50] sm:$0xff]
    %v649 = vld [vmem:[#allocation7 + $0x58] sm:$0xff]
    %v650 = vld [vmem:[#allocation7 + $0x60] sm:$0xff]
    %v651 = vld [vmem:[#allocation7 + $0x68] sm:$0xff]
    %v652 = vld [vmem:[#allocation7 + $0x70] sm:$0xff]
    %v653 = vld [vmem:[#allocation7 + $0x78] sm:$0xff]
    %v654 = vld [vmem:[#allocation7 + $0x80] sm:$0xff]
    %v655 = vld [vmem:[#allocation7 + $0x88] sm:$0xff]
    %v656 = vld [vmem:[#allocation7 + $0x90] sm:$0xff]
    %v657 = vld [vmem:[#allocation7 + $0x98] sm:$0xff]
    %v658 = vld [vmem:[#allocation7 + $0xa0] sm:$0xff]
    %v659 = vld [vmem:[#allocation7 + $0xa8] sm:$0xff]
    %v660 = vld [vmem:[#allocation7 + $0xb0] sm:$0xff]
    %v661 = vld [vmem:[#allocation7 + $0xb8] sm:$0xff]
    %v662 = vld [vmem:[#allocation7 + $0xc0] sm:$0xff]
    %v663 = vld [vmem:[#allocation7 + $0xc8] sm:$0xff]
    %v664 = vld [vmem:[#allocation7 + $0xd0] sm:$0xff]
    %v665 = vld [vmem:[#allocation7 + $0xd8] sm:$0xff]
    %v666 = vld [vmem:[#allocation7 + $0xe0] sm:$0xff]
    %v667 = vld [vmem:[#allocation7 + $0xe8] sm:$0xff]
    %v668 = vld [vmem:[#allocation7 + $0xf0] sm:$0xff]
    %v669 = vld [vmem:[#allocation7 + $0xf8] sm:$0xff]
    %v670 = vld [vmem:[#allocation9] sm:$0x3]
    %v672 = vlaneseq
    %v673 = vshrl.u32 %v672, 7
    %v674 = vsub.s32 0, %v673
    %v675 = vrot.slane %v670, %v674
    %v676 = vlaneseq
    %v677 = vshrl.u32 %v676, 7
    %v678 = vsub.s32 1, %v677
    %v679 = vrot.slane %v670, %v678
    %v714 = vunpack.c.l.b16 %v638
    %v715 = vunpack.c.h.b16 %v638
    %v716 = vunpack.c.l.b16 %v639
    %v717 = vunpack.c.h.b16 %v639
    %v718 = vunpack.c.l.b16 %v640
    %v719 = vunpack.c.h.b16 %v640
    %v720 = vunpack.c.l.b16 %v641
    %v721 = vunpack.c.h.b16 %v641
    %v722 = vunpack.c.l.b16 %v642
    %v723 = vunpack.c.h.b16 %v642
    %v724 = vunpack.c.l.b16 %v643
    %v725 = vunpack.c.h.b16 %v643
    %v726 = vunpack.c.l.b16 %v644
    %v727 = vunpack.c.h.b16 %v644
    %v728 = vunpack.c.l.b16 %v645
    %v729 = vunpack.c.h.b16 %v645
    %v730 = vunpack.c.l.b16 %v646
    %v731 = vunpack.c.h.b16 %v646
    %v732 = vunpack.c.l.b16 %v647
    %v733 = vunpack.c.h.b16 %v647
    %v734 = vunpack.c.l.b16 %v648
    %v735 = vunpack.c.h.b16 %v648
    %v736 = vunpack.c.l.b16 %v649
    %v737 = vunpack.c.h.b16 %v649
    %v738 = vunpack.c.l.b16 %v650
    %v739 = vunpack.c.h.b16 %v650
    %v740 = vunpack.c.l.b16 %v651
    %v741 = vunpack.c.h.b16 %v651
    %v742 = vunpack.c.l.b16 %v652
    %v743 = vunpack.c.h.b16 %v652
    %v744 = vunpack.c.l.b16 %v653
    %v745 = vunpack.c.h.b16 %v653
    %v746 = vunpack.c.l.b16 %v654
    %v747 = vunpack.c.h.b16 %v654
    %v748 = vunpack.c.l.b16 %v655
    %v749 = vunpack.c.h.b16 %v655
    %v750 = vunpack.c.l.b16 %v656
    %v751 = vunpack.c.h.b16 %v656
    %v752 = vunpack.c.l.b16 %v657
    %v753 = vunpack.c.h.b16 %v657
    %v754 = vunpack.c.l.b16 %v658
    %v755 = vunpack.c.h.b16 %v658
    %v756 = vunpack.c.l.b16 %v659
    %v757 = vunpack.c.h.b16 %v659
    %v758 = vunpack.c.l.b16 %v660
    %v759 = vunpack.c.h.b16 %v660
    %v760 = vunpack.c.l.b16 %v661
    %v761 = vunpack.c.h.b16 %v661
    %v762 = vunpack.c.l.b16 %v662
    %v763 = vunpack.c.h.b16 %v662
    %v764 = vunpack.c.l.b16 %v663
    %v765 = vunpack.c.h.b16 %v663
    %v766 = vunpack.c.l.b16 %v664
    %v767 = vunpack.c.h.b16 %v664
    %v768 = vunpack.c.l.b16 %v665
    %v769 = vunpack.c.h.b16 %v665
    %v770 = vunpack.c.l.b16 %v666
    %v771 = vunpack.c.h.b16 %v666
    %v772 = vunpack.c.l.b16 %v667
    %v773 = vunpack.c.h.b16 %v667
    %v774 = vunpack.c.l.b16 %v668
    %v775 = vunpack.c.h.b16 %v668
    %v776 = vunpack.c.l.b16 %v669
    %v777 = vunpack.c.h.b16 %v669
    %v778 = vpack.c.b16 %v716, %v714
    %v779 = vpack.c.b16 %v717, %v715
    %v780 = vpack.c.b16 %v720, %v718
    %v781 = vpack.c.b16 %v721, %v719
    %v782 = vpack.c.b16 %v724, %v722
    %v783 = vpack.c.b16 %v725, %v723
    %v784 = vpack.c.b16 %v728, %v726
    %v785 = vpack.c.b16 %v729, %v727
    %v786 = vpack.c.b16 %v732, %v730
    %v787 = vpack.c.b16 %v733, %v731
    %v788 = vpack.c.b16 %v736, %v734
    %v789 = vpack.c.b16 %v737, %v735
    %v790 = vpack.c.b16 %v740, %v738
    %v791 = vpack.c.b16 %v741, %v739
    %v792 = vpack.c.b16 %v744, %v742
    %v793 = vpack.c.b16 %v745, %v743
    %v794 = vpack.c.b16 %v748, %v746
    %v795 = vpack.c.b16 %v749, %v747
    %v796 = vpack.c.b16 %v752, %v750
    %v797 = vpack.c.b16 %v753, %v751
    %v798 = vpack.c.b16 %v756, %v754
    %v799 = vpack.c.b16 %v757, %v755
    %v800 = vpack.c.b16 %v760, %v758
    %v801 = vpack.c.b16 %v761, %v759
    %v802 = vpack.c.b16 %v764, %v762
    %v803 = vpack.c.b16 %v765, %v763
    %v804 = vpack.c.b16 %v768, %v766
    %v805 = vpack.c.b16 %v769, %v767
    %v806 = vpack.c.b16 %v772, %v770
    %v807 = vpack.c.b16 %v773, %v771
    %v808 = vpack.c.b16 %v776, %v774
    %v809 = vpack.c.b16 %v777, %v775
    %842 = vmatprep.subr.bf16.mxu0 %v779
    %843 = vmatpush1.bf16.msra.mxu0 %v778
    %844 = vmatprep.subr.bf16.mxu0 %v781
    %845 = vmatpush1.bf16.msra.mxu0 %v780
    %846 = vmatprep.subr.bf16.mxu0 %v783
    %847 = vmatpush1.bf16.msra.mxu0 %v782
    %848 = vmatprep.subr.bf16.mxu0 %v785
    %849 = vmatpush1.bf16.msra.mxu0 %v784
    %850 = vmatprep.subr.bf16.mxu0 %v787
    %851 = vmatpush1.bf16.msra.mxu0 %v786
    %852 = vmatprep.subr.bf16.mxu0 %v789
    %853 = vmatpush1.bf16.msra.mxu0 %v788
    %854 = vmatprep.subr.bf16.mxu0 %v791
    %855 = vmatpush1.bf16.msra.mxu0 %v790
    %856 = vmatprep.subr.bf16.mxu0 %v793
    %857 = vmatpush1.bf16.msra.mxu0 %v792
    %858 = vmatprep.subr.bf16.mxu0 %v795
    %859 = vmatpush1.bf16.msra.mxu0 %v794
    %860 = vmatprep.subr.bf16.mxu0 %v797
    %861 = vmatpush1.bf16.msra.mxu0 %v796
    %862 = vmatprep.subr.bf16.mxu0 %v799
    %863 = vmatpush1.bf16.msra.mxu0 %v798
    %864 = vmatprep.subr.bf16.mxu0 %v801
    %865 = vmatpush1.bf16.msra.mxu0 %v800
    %866 = vmatprep.subr.bf16.mxu0 %v803
    %867 = vmatpush1.bf16.msra.mxu0 %v802
    %868 = vmatprep.subr.bf16.mxu0 %v805
    %869 = vmatpush1.bf16.msra.mxu0 %v804
    %870 = vmatprep.subr.bf16.mxu0 %v807
    %871 = vmatpush1.bf16.msra.mxu0 %v806
    %872 = vmatprep.subr.bf16.mxu0 %v809
    %873 = vmatpush1.bf16.msra.mxu0 %v808
    %874 = vmatprep.mubr.bf16.mxu0 %v390
    %875 = vmatmul.mubr.bf16.gmra.mrb[0].mxu0 %v389
    %v876 = vpop.f32.mrb[0].mxu0
    %v877 = vadd.f32 %v675, %v876
    %v878 = vpop.f32.mrb[0].mxu0
    %v879 = vadd.f32 %v679, %v878
    %v880 = vpop.f32.mrb[0].mxu0
    %v881 = vpop.f32.mrb[0].mxu0
    %882 = vdwg.mxu0
    %v883 = vmax.f32 %v877, 0.0
    %v884 = vmax.f32 %v879, 0.0
    %v885 = vld [vmem:[%s9] sm:$0x3]
    %v887 = vlaneseq
    %v888 = vshrl.u32 %v887, 7
    %v889 = vsub.s32 0, %v888
    %v890 = vrot.slane %v885, %v889
    %v891 = vlaneseq
    %v892 = vshrl.u32 %v891, 7
    %v893 = vsub.s32 1, %v892
    %v894 = vrot.slane %v885, %v893
    %v897 = vmul.f32 %v636, %v890
    %v898 = vmul.f32 %v637, %v894
    %v899 = vadd.f32 %v897, %v898
    %900 = vadd.xlane.f32.xlu0 %v899
    %v901 = vpop.xlane.xlu0 %900
    %v902 = vld [vmem:[%s10] sm:$0x3]
    %v904 = vlaneseq
    %v905 = vshrl.u32 %v904, 7
    %v906 = vsub.s32 0, %v905
    %v907 = vrot.slane %v902, %v906
    %v908 = vlaneseq
    %v909 = vshrl.u32 %v908, 7
    %v910 = vsub.s32 1, %v909
    %v911 = vrot.slane %v902, %v910
    %v914 = vmul.f32 %v883, %v907
    %v915 = vmul.f32 %v884, %v911
    %v916 = vadd.f32 %v914, %v915
    %917 = vadd.xlane.f32.xlu0 %v916
    %v918 = vpop.xlane.xlu0 %917
    %v919 = vlaneseq
    %v920 = vand.u32 %v919, 127
    %vm921 = vcmp.eq.s32.totalorder %v920, 0
    %v922 = vsel %vm921, %v901, %v918
    %v923 = vld [vmem:[#allocation10] sm:$0x1]
    %v925 = vlaneseq
    %v926 = vshrl.u32 %v925, 7
    %v927 = vsub.s32 0, %v926
    %v928 = vrot.slane %v923, %v927
    %v930 = vadd.f32 %v922, %v928
    %vm931 = vcmask 15360
    %932 = vst.msk [vmem:[%s12] sm:$0xff] %vm931, %v930
    // Predicated region
    $region74: #{critic_forward.1} parent=1 // pred_check
      _
    $region75: #{critic_forward.1} parent=1 // pred_check_branch
      %934 = sbr.rel (0) target = $region77
    $region76: #{critic_forward.1} parent=1 // pred_region
      _
    $region77: #{critic_forward.1} parent=1 // pred_fallthru
      _
    // Predicated region
    $region78: #{critic_forward.1} parent=1 // pred_check
      _
    $region79: #{critic_forward.1} parent=1 // pred_check_branch
      %936 = sbr.rel (0) target = $region81
    $region80: #{critic_forward.1} parent=1 // pred_region
      _
    $region81: #{critic_forward.1} parent=1 // pred_fallthru
      _
    %937 = vsyncpa [#allocation3], 1
    %938 = vsyncpa [#allocation5], 1
    %939 = vsyncpa [#allocation8], 1
    %940 = vsyncpa [#allocation11], 1

</llo_original>
